<compile_context>
chip_gen: v7x
topology: tpu7x:2x2x1
jax: 0.10.0
libtpu: 0.0.40
codegen_flags: <defaults>
</compile_context>

<pallas_src>
import functools

import jax
import jax.numpy as jnp
from jax.experimental import pallas as pl
from jax.experimental.pallas import tpu as pltpu


def _contrastive_kernel(x1_ref, x2_ref, same_ref, out_ref, *,
                        margin, block_rows, total_rows):
    # Upcast to f32 *before* the subtraction so bf16 cancellation does not
    # degrade the squared distance.
    x1 = x1_ref[...].astype(jnp.float32)                    # (TB, d)
    x2 = x2_ref[...].astype(jnp.float32)                    # (TB, d)
    diff = x1 - x2
    d = jnp.sum(diff * diff, axis=-1, keepdims=True)        # (TB, 1) f32
    # Single XLU relayout to lane-dense so hinge/select/sum run on dense vregs.
    d_t = jnp.transpose(d)                                   # (1, TB)
    ind = same_ref[...]                                      # (1, TB) f32 0/1
    hinge = jnp.maximum(margin - d_t, 0.0)                   # relu(margin - d)
    loss = ind * d_t + (1.0 - ind) * hinge                   # (1, TB)
    # Mask the ragged tail tile: rows past `total_rows` read unspecified data
    # (no padding of x1/x2 in the wrapper), so they must not reach the sum.
    rows_left = total_rows - pl.program_id(0) * block_rows
    lane = jax.lax.broadcasted_iota(jnp.int32, (1, block_rows), 1)
    loss = jnp.where(lane < rows_left, loss, 0.0)
    out_ref[...] = jnp.sum(loss, keepdims=True)              # (1, 1) partial


def _vmem_capacity_bytes() -> int:
    """Per-TensorCore VMEM capacity; conservative fallback is v7x's 64 MiB."""
    try:
        info = pltpu.get_tpu_info()
        cap = getattr(info, "vmem_capacity_bytes", None)
        if cap:
            return int(cap)
    except Exception:
        pass
    return 64 * 1024 * 1024


def _choose_block_b(batch: int, feat: int, itemsize: int, vmem_cap: int) -> int:
    """Batch-tile size derived from the VMEM budget (no hardcoded row cap).

    Budget = 2 inputs x 2 pipeline buffers x (rows*feat*itemsize)
             + 2 buffers of the lane-dense indicator ((1,rows) f32, sublane-
             padded to 8 rows).  Capped at min(vmem_cap/2, 48 MiB) so the
    same logic is safe on v7x (64 MiB/TC) and roomy on v5e/v6e (128 MiB).
    """
    budget = min(vmem_cap // 2, 48 * 1024 * 1024)
    per_row = 4 * feat * itemsize + 2 * 8 * 4
    rows = max(8, (int(budget // per_row) // 8) * 8)
    if rows >= batch:
        if batch >= 16:
            # Keep >=2 tiles so the "parallel" grid axis can shard across both
            # TensorCores on v7x (harmless ~0.35us/step elsewhere).
            rows = ((((batch + 1) // 2) + 7) // 8) * 8
        else:
            rows = batch          # single exact tile, no OOB reads at all
    return int(rows)


def contrastive_loss(x1, x2, label1, label2, margin: float = 1.0, block_b=None):
    """Pallas equivalent of Contrastive_Loss.forward.

    Args:
        x1, x2: [B, d] float arrays (any float dtype; upcast to f32 in-kernel).
        label1, label2: [B] integer arrays.
    Returns:
        scalar float32 loss.
    """
    B, d = x1.shape
    itemsize = jnp.dtype(x1.dtype).itemsize
    vmem_cap = _vmem_capacity_bytes()

    if block_b is None:
        block_b = _choose_block_b(B, d, itemsize, vmem_cap)
    else:
        block_b = int(block_b)
        block_b = B if block_b >= B else max(8, (block_b // 8) * 8)

    num_tiles = pl.cdiv(B, block_b)

    # Single lane-dense f32 indicator instead of two lane-padded label tiles.
    # Only this tiny [B] vector is padded -- x1/x2 are streamed unpadded.
    same = (label1 == label2).astype(jnp.float32)
    pad = num_tiles * block_b - B
    if pad:
        same = jnp.pad(same, (0, pad))
    same = same.reshape(num_tiles, block_b)

    # Generation-aware scoped-VMEM limit (double-buffered inputs + indicator).
    block_in_bytes = block_b * d * itemsize
    ind_block_bytes = 8 * block_b * 4
    total_bytes = 4 * block_in_bytes + 2 * ind_block_bytes + (1 << 20)
    vmem_limit = int(min(vmem_cap - (8 << 20), max(32 << 20, total_bytes)))

    partials = pl.pallas_call(
        functools.partial(
            _contrastive_kernel,
            margin=float(margin),
            block_rows=block_b,
            total_rows=B,
        ),
        grid=(num_tiles,),
        in_specs=[
            pl.BlockSpec((block_b, d), lambda i: (i, 0)),   # x1 tile (native dtype)
            pl.BlockSpec((block_b, d), lambda i: (i, 0)),   # x2 tile (native dtype)
            pl.BlockSpec((1, block_b), lambda i: (i, 0)),   # lane-dense indicator
        ],
        out_specs=pl.BlockSpec((1, 1), lambda i: (i, 0)),   # per-tile partial sum
        out_shape=jax.ShapeDtypeStruct((num_tiles, 1), jnp.float32),
        compiler_params=pltpu.CompilerParams(
            dimension_semantics=("parallel",),       # batch tiles are independent
            vmem_limit_bytes=vmem_limit,
        ),
    )(x1, x2, same)

    # Mean over the *original* batch, applied exactly once, outside the grid.
    return jnp.sum(partials) * (1.0 / B)


def _reference(x1, x2, label1, label2, margin=1.0):
    ind = (label1 == label2).astype(jnp.float32)
    dist = jnp.sum((x1 - x2) ** 2, axis=-1)
    loss = ind * dist + (1.0 - ind) * jnp.maximum(margin - dist, 0.0)
    return jnp.mean(loss)


if __name__ == "__main__":
    key = jax.random.PRNGKey(0)
    k1, k2, k3, k4 = jax.random.split(key, 4)

    # Case 1: f32, batch a multiple of 8 (single exact tile).
    B, D = 8, 32
    x1 = jax.random.normal(k1, (B, D), dtype=jnp.float32)
    x2 = jax.random.normal(k2, (B, D), dtype=jnp.float32)
    l1 = jax.random.randint(k3, (B,), 0, 3, dtype=jnp.int32)
    l2 = jax.random.randint(k4, (B,), 0, 3, dtype=jnp.int32)
    loss = jax.block_until_ready(contrastive_loss(x1, x2, l1, l2, margin=1.0))
    ref = _reference(x1, x2, l1, l2, margin=1.0)
    assert jnp.allclose(loss, ref, rtol=1e-5, atol=1e-5), (loss, ref)

    # Case 2: bf16 inputs + ragged batch handled as one exact full-array tile
    # (exercises native-dtype streaming and in-kernel f32 upcast; no x pad).
    B2, D2 = 13, 32
    x1b = jax.random.normal(k1, (B2, D2), dtype=jnp.bfloat16)
    x2b = jax.random.normal(k2, (B2, D2), dtype=jnp.bfloat16)
    l1b = jax.random.randint(k3, (B2,), 0, 3, dtype=jnp.int32)
    l2b = jax.random.randint(k4, (B2,), 0, 3, dtype=jnp.int32)
    loss_b = jax.block_until_ready(contrastive_loss(x1b, x2b, l1b, l2b, margin=1.0))
    ref_b = _reference(x1b.astype(jnp.float32), x2b.astype(jnp.float32), l1b, l2b, margin=1.0)
    assert jnp.allclose(loss_b, ref_b, rtol=1e-4, atol=1e-5), (loss_b, ref_b)

    # Case 3: multi-tile grid with a ragged, in-kernel-masked final tile and
    # per-tile partial sums (300 rows, block_b=128 -> tiles of 128/128/44).
    B3, D3 = 300, 64
    x1c = jax.random.normal(k1, (B3, D3), dtype=jnp.float32)
    x2c = jax.random.normal(k2, (B3, D3), dtype=jnp.float32)
    l1c = jax.random.randint(k3, (B3,), 0, 4, dtype=jnp.int32)
    l2c = jax.random.randint(k4, (B3,), 0, 4, dtype=jnp.int32)
    loss_c = jax.block_until_ready(
        contrastive_loss(x1c, x2c, l1c, l2c, margin=1.0, block_b=128))
    ref_c = _reference(x1c, x2c, l1c, l2c, margin=1.0)
    assert jnp.allclose(loss_c, ref_c, rtol=1e-4, atol=1e-5), (loss_c, ref_c)

    print("KERNEL_OK")
</pallas_src>

<mosaic_0001>
module attributes {stable_mosaic.version = 11 : i64} {
  func.func @_contrastive_kernel(%arg0: i32, %arg1: memref<8x32xf32, #tpu.memory_space<vmem>>, %arg2: memref<8x32xf32, #tpu.memory_space<vmem>>, %arg3: memref<1x8xf32, #tpu.memory_space<vmem>>, %arg4: memref<1x1xf32, #tpu.memory_space<vmem>>) attributes {dimension_semantics = [#tpu.dimension_semantics<parallel>], iteration_bounds = array<i64: 1>, scalar_prefetch = 0 : i64, scratch_operands = 0 : i64, tpu.core_type = #tpu.core_type<tc>, window_params = [{transform_indices = @transform_0, window_bounds = array<i64: 8, 32>}, {transform_indices = @transform_1, window_bounds = array<i64: 8, 32>}, {transform_indices = @transform_2, window_bounds = array<i64: 1, 8>}, {transform_indices = @transform_3, window_bounds = array<i64: 1, 1>}]} {
    %c0 = arith.constant 0 : index
    %c0_0 = arith.constant 0 : index
    %0 = vector.load %arg1[%c0, %c0_0] : memref<8x32xf32, #tpu.memory_space<vmem>>, vector<8x32xf32>
    %c0_1 = arith.constant 0 : index
    %c0_2 = arith.constant 0 : index
    %1 = vector.load %arg2[%c0_1, %c0_2] : memref<8x32xf32, #tpu.memory_space<vmem>>, vector<8x32xf32>
    %2 = arith.subf %0, %1 : vector<8x32xf32>
    %3 = arith.mulf %2, %2 : vector<8x32xf32>
    %cst = arith.constant dense<0.000000e+00> : vector<8xf32>
    %4 = vector.multi_reduction <add>, %3, %cst [1] : vector<8x32xf32> to vector<8xf32>
    %5 = vector.shape_cast %4 : vector<8xf32> to vector<8x1xf32>
    %6 = tpu.transpose %5, [1, 0] : vector<8x1xf32> -> vector<1x8xf32>
    %c0_3 = arith.constant 0 : index
    %c0_4 = arith.constant 0 : index
    %7 = vector.load %arg3[%c0_3, %c0_4] : memref<1x8xf32, #tpu.memory_space<vmem>>, vector<1x8xf32>
    %cst_5 = arith.constant 1.000000e+00 : f32
    %8 = vector.broadcast %cst_5 : f32 to vector<1x8xf32>
    %9 = arith.subf %8, %6 : vector<1x8xf32>
    %cst_6 = arith.constant 0.000000e+00 : f32
    %10 = vector.broadcast %cst_6 : f32 to vector<1x8xf32>
    %11 = arith.maximumf %9, %10 : vector<1x8xf32>
    %12 = arith.mulf %7, %6 : vector<1x8xf32>
    %cst_7 = arith.constant 1.000000e+00 : f32
    %13 = vector.broadcast %cst_7 : f32 to vector<1x8xf32>
    %14 = arith.subf %13, %7 : vector<1x8xf32>
    %15 = arith.mulf %14, %11 : vector<1x8xf32>
    %16 = arith.addf %12, %15 : vector<1x8xf32>
    %c8_i32 = arith.constant 8 : i32
    %17 = arith.muli %arg0, %c8_i32 : i32
    %c8_i32_8 = arith.constant 8 : i32
    %18 = arith.subi %c8_i32_8, %17 : i32
    %19 = tpu.iota {dimensions = array<i32: 1>} : vector<1x8xi32>
    %20 = vector.broadcast %18 : i32 to vector<1x8xi32>
    %21 = arith.cmpi slt, %19, %20 : vector<1x8xi32>
    %cst_9 = arith.constant 0.000000e+00 : f32
    %22 = vector.broadcast %cst_9 : f32 to vector<1x8xf32>
    %23 = arith.select %21, %16, %22 : vector<1x8xi1>, vector<1x8xf32>
    %24 = vector.shape_cast %23 : vector<1x8xf32> to vector<1x1x8xf32>
    %cst_10 = arith.constant dense<0.000000e+00> : vector<1xf32>
    %25 = vector.multi_reduction <add>, %24, %cst_10 [1, 2] : vector<1x1x8xf32> to vector<1xf32>
    %26 = vector.shape_cast %25 : vector<1xf32> to vector<1x1x1xf32>
    %27 = vector.extract %26[0, 0, 0] : f32 from vector<1x1x1xf32>
    %28 = vector.broadcast %27 : f32 to vector<1x1xf32>
    %c0_11 = arith.constant 0 : index
    %c0_12 = arith.constant 0 : index
    %29 = vector.load %arg4[%c0_11, %c0_12] : memref<1x1xf32, #tpu.memory_space<vmem>>, vector<1x1xf32>
    tpu.vector_store %arg4[%c0_11, %c0_12], %28 {strides = array<i32>} : memref<1x1xf32, #tpu.memory_space<vmem>>, vector<1x1xf32>,
    return
  }
  func.func @transform_0(%arg0: i32) -> (i32, i32) {
    %c0_i32 = arith.constant 0 : i32
    %c0_i32_0 = arith.constant 0 : i32
    return %arg0, %c0_i32 : i32, i32
  }
  func.func @transform_1(%arg0: i32) -> (i32, i32) {
    %c0_i32 = arith.constant 0 : i32
    %c0_i32_0 = arith.constant 0 : i32
    return %arg0, %c0_i32 : i32, i32
  }
  func.func @transform_2(%arg0: i32) -> (i32, i32) {
    %c0_i32 = arith.constant 0 : i32
    %c0_i32_0 = arith.constant 0 : i32
    return %arg0, %c0_i32 : i32, i32
  }
  func.func @transform_3(%arg0: i32) -> (i32, i32) {
    %c0_i32 = arith.constant 0 : i32
    %c0_i32_0 = arith.constant 0 : i32
    return %arg0, %c0_i32 : i32, i32
  }
}

</mosaic_0001>

<llo_original>
// kernel: tpu_custom_call.1
$region0: #{tpu_custom_call.1}
  #allocation0 [shape = 'u32[]', space=smem, size = 0x4, offset = 0x4, fixed_abs, tag = 'smem constant byte address 0x4 - core index']
  #allocation1 [shape = 'u32[144,128]{1,0:T(1,128)}', space=vmem, size = 0x12000, scoped, tag = 'internal scratch']
  %s0 = inlined_call_operand.hbm [shape: f32[8,32], index: 0, kind: input, shape index: {}]
  %s1 = inlined_call_operand.hbm [shape: f32[8,32], index: 1, kind: input, shape index: {}]
  %s2 = inlined_call_operand.vmem [shape: f32[1,8], index: 2, kind: input, shape index: {}]
  %s3 = inlined_call_operand.hbm [shape: f32[1,1], index: 3, kind: output, shape index: {}]
  %s4 = sld [smem:[#allocation0]]
  $region30: #{tpu_custom_call.1} parent=0
    _
  %s6 = ssub.s32 1, %s4
  %s7 = scalar_select 0, %s6, %s4
  $region1: #{tpu_custom_call.1} parent=0
    #allocation2 [shape = 'u8[4096]{0}', space=vmem, size = 0x1000, scoped, tag = 'input window, operand 0, single buffered']
    #allocation3 [shape = 's32[1]{0}', space=sflag, size = 0x4, scoped, tag = 'scoped memory for tpu_custom_call.1']
    #allocation4 [shape = 's32[1]{0}', space=sflag, size = 0x4, scoped, tag = 'scoped memory for tpu_custom_call.1']
    #allocation5 [shape = 'u8[4096]{0}', space=vmem, size = 0x1000, scoped, tag = 'input window, operand 1, single buffered']
    #allocation6 [shape = 's32[1]{0}', space=sflag, size = 0x4, scoped, tag = 'scoped memory for tpu_custom_call.1']
    #allocation7 [shape = 'u8[512]{0}', space=vmem, size = 0x400, scoped, tag = 'output window, operand 0, single buffered']
    %8 = vsyncpa [#allocation3], 0
    %9 = vsyncpa [#allocation6], 0
    %10 = vsyncpa [#allocation4], 0
    // Predicated region
    $region2: #{tpu_custom_call.1} parent=1 // pred_check
      _
    $region3: #{tpu_custom_call.1} parent=1 // pred_check_branch
      %12 = sbr.rel (0) target = $region5
    $region4: #{tpu_custom_call.1} parent=1 // pred_region
      %s14 = ssub.s32 128, 128
      %15 = vsyncadd [#allocation3], %s14
      %s17 = sshll.u32 [#allocation2], 4
      %s18 = int_to_ptr.vmem [resolvable:$true] %s17
      %20 = dma.hbm_to_vmem [thread:$0]  %s0, 128, %s18, [#allocation3]
    $region5: #{tpu_custom_call.1} parent=1 // pred_fallthru
      _
    // Predicated region
    $region6: #{tpu_custom_call.1} parent=1 // pred_check
      _
    $region7: #{tpu_custom_call.1} parent=1 // pred_check_branch
      %22 = sbr.rel (0) target = $region9
    $region8: #{tpu_custom_call.1} parent=1 // pred_region
      %s24 = ssub.s32 128, 128
      %25 = vsyncadd [#allocation6], %s24
      %s27 = sshll.u32 [#allocation5], 4
      %s28 = int_to_ptr.vmem [resolvable:$true] %s27
      %30 = dma.hbm_to_vmem [thread:$0]  %s1, 128, %s28, [#allocation6]
    $region9: #{tpu_custom_call.1} parent=1 // pred_fallthru
      _
    // Predicated region
    $region10: #{tpu_custom_call.1} parent=1 // pred_check
      _
    $region11: #{tpu_custom_call.1} parent=1 // pred_check_branch
      %32 = sbr.rel (0) target = $region13
    $region12: #{tpu_custom_call.1} parent=1 // pred_region
      _
    $region13: #{tpu_custom_call.1} parent=1 // pred_fallthru
      _
    // Predicated region
    $region14: #{tpu_custom_call.1} parent=1 // pred_check
      _
    $region15: #{tpu_custom_call.1} parent=1 // pred_check_branch
      %34 = sbr.rel (0) target = $region17
    $region16: #{tpu_custom_call.1} parent=1 // pred_region
      %35 = dma.done [#allocation3], 128
    $region17: #{tpu_custom_call.1} parent=1 // pred_fallthru
      _
    // Predicated region
    $region18: #{tpu_custom_call.1} parent=1 // pred_check
      _
    $region19: #{tpu_custom_call.1} parent=1 // pred_check_branch
      %37 = sbr.rel (0) target = $region21
    $region20: #{tpu_custom_call.1} parent=1 // pred_region
      %38 = dma.done [#allocation6], 128
    $region21: #{tpu_custom_call.1} parent=1 // pred_fallthru
      _
    %v39 = vld [vmem:[#allocation2] sm:$0xff]
    %v40 = vld [vmem:[#allocation5] sm:$0xff]
    %v41 = vsub.f32 %v39, %v40
    %v42 = vmul.f32 %v41, %v41
    %vm43 = vcmask 261120
    %v44 = vsel %vm43, %v42, 0.0
    %45 = vadd.xlane.f32.xlu0 %v44
    %v46 = vpop.xlane.xlu0 %45
    %47 = vxpose.xlu0.b32.start [1/16] %v46, 128
    %48 = vxpose.xlu0.b32.cont [2/16] 0.0, 128
    %49 = vxpose.xlu0.b32.cont [3/16] 0.0, 128
    %50 = vxpose.xlu0.b32.cont [4/16] 0.0, 128
    %51 = vxpose.xlu0.b32.cont [5/16] 0.0, 128
    %52 = vxpose.xlu0.b32.cont [6/16] 0.0, 128
    %53 = vxpose.xlu0.b32.cont [7/16] 0.0, 128
    %54 = vxpose.xlu0.b32.cont [8/16] 0.0, 128
    %55 = vxpose.xlu0.b32.cont [9/16] 0.0, 128
    %56 = vxpose.xlu0.b32.cont [10/16] 0.0, 128
    %57 = vxpose.xlu0.b32.cont [11/16] 0.0, 128
    %58 = vxpose.xlu0.b32.cont [12/16] 0.0, 128
    %59 = vxpose.xlu0.b32.cont [13/16] 0.0, 128
    %60 = vxpose.xlu0.b32.cont [14/16] 0.0, 128
    %61 = vxpose.xlu0.b32.cont [15/16] 0.0, 128
    %62 = vxpose.xlu0.b32.end [16/16] 0.0, 128
    %v63 = vpop.trf.xlu0
    %v64 = vpop.trf.xlu0
    %v65 = vpop.trf.xlu0
    %v66 = vpop.trf.xlu0
    %v67 = vpop.trf.xlu0
    %v68 = vpop.trf.xlu0
    %v69 = vpop.trf.xlu0
    %v70 = vpop.trf.xlu0
    %v71 = vpop.trf.xlu0
    %v72 = vpop.trf.xlu0
    %v73 = vpop.trf.xlu0
    %v74 = vpop.trf.xlu0
    %v75 = vpop.trf.xlu0
    %v76 = vpop.trf.xlu0
    %v77 = vpop.trf.xlu0
    %v78 = vpop.trf.xlu0
    %v79 = vld [vmem:[%s2] sm:$0x1]
    %v80 = vsub.f32 1.0, %v63
    %v81 = vmax.f32 %v80, 0.0
    %v82 = vmul.f32 %v79, %v63
    %v83 = vsub.f32 1.0, %v79
    %v84 = vmul.f32 %v83, %v81
    %v85 = vadd.f32 %v82, %v84
    %s86 = smul.u32 0, 8
    %s87 = ssub.s32 8, %s86
    %v88 = vlaneseq
    %v89 = vand.u32 %v88, 127
    %v90 = vstv %s87
    %vm91 = vcmp.lt.s32.totalorder %v89, %v90
    %v92 = vsel %vm91, %v85, 0.0
    %vm93 = vcmask 57344
    %v94 = vsel %vm93, %v92, 0.0
    %95 = vadd.xlane.f32.xlu0 %v94
    %v96 = vpop.xlane.xlu0 %95
    %v97 = vrot.slane %v96, 4
    %v98 = vadd.f32 %v96, %v97
    %v99 = vrot.slane %v98, 2
    %v100 = vadd.f32 %v98, %v99
    %v101 = vrot.slane %v100, 1
    %v102 = vadd.f32 %v100, %v101
    %s103 = vtos %v102
    %v104 = vstv %s103
    %vm105 = vcmask 0
    %106 = vst.msk [vmem:[#allocation7] sm:$0x1] %vm105, %v104
    // Predicated region
    $region22: #{tpu_custom_call.1} parent=1 // pred_check
      _
    $region23: #{tpu_custom_call.1} parent=1 // pred_check_branch
      %108 = sbr.rel (0) target = $region25
    $region24: #{tpu_custom_call.1} parent=1 // pred_region
      %s110 = ssub.s32 16, 16
      %111 = vsyncadd [#allocation4], %s110
      %s113 = sshll.u32 [#allocation7], 4
      %s114 = int_to_ptr.vmem [resolvable:$true] %s113
      %116 = dma.vmem_to_hbm [thread:$0]  %s114, 16, %s3, [#allocation4]
    $region25: #{tpu_custom_call.1} parent=1 // pred_fallthru
      _
    // Predicated region
    $region26: #{tpu_custom_call.1} parent=1 // pred_check
      _
    $region27: #{tpu_custom_call.1} parent=1 // pred_check_branch
      %118 = sbr.rel (0) target = $region29
    $region28: #{tpu_custom_call.1} parent=1 // pred_region
      %119 = dma.done [#allocation4], 16
    $region29: #{tpu_custom_call.1} parent=1 // pred_fallthru
      _
    %120 = vsyncpa [#allocation3], 1
    %121 = vsyncpa [#allocation6], 1
    %122 = vsyncpa [#allocation4], 1

</llo_original>
